<compile_context>
chip_gen: v7x
topology: tpu7x:2x2x1
jax: 0.10.0
libtpu: 0.0.40
codegen_flags: <defaults>
</compile_context>

<pallas_src>
from functools import partial

import jax
import jax.numpy as jnp
from jax.experimental import pallas as pl
from jax.experimental.pallas import tpu as pltpu


def _pa_kernel(x_ref, w_ref, b_ref, m_ref, o_ref, *, H, W):
    # x_ref: (1, cblk, HW)  activations (channels on sublanes, spatial on lanes)
    # w_ref: (cblk, 9)      depthwise 3x3 taps, tap index = kh*3 + kw
    # b_ref: (cblk, 1)      per-channel bias
    # m_ref: (4, HW)        f32 0/1 boundary masks: [col>=1, col<=W-2, row>=1, row<=H-2]
    # o_ref: (1, cblk, HW)
    HW = H * W
    xf = x_ref[0].astype(jnp.float32)            # (cblk, HW)
    w = w_ref[...].astype(jnp.float32)           # (cblk, 9)
    b = b_ref[...].astype(jnp.float32)           # (cblk, 1)
    m = m_ref[...]                               # (4, HW), broadcasts over sublanes

    col_m1 = m[0:1]                              # valid when col(i) >= 1
    col_p1 = m[1:2]                              # valid when col(i) <= W-2
    row_m1 = m[2:3]                              # valid when row(i) >= 1
    row_p1 = m[3:4]                              # valid when row(i) <= H-2

    # Column pass: x_m1[i] = x[i-1], x_p1[i] = x[i+1] (zero outside the row).
    x_m1 = pltpu.roll(xf, shift=1, axis=1) * col_m1
    x_p1 = pltpu.roll(xf, shift=HW - 1, axis=1) * col_p1

    # Per-row weighted sums (no rolls needed here); weights broadcast over lanes.
    def row_sum(kh):
        return (x_m1 * w[:, 3 * kh + 0:3 * kh + 1]
                + xf * w[:, 3 * kh + 1:3 * kh + 2]
                + x_p1 * w[:, 3 * kh + 2:3 * kh + 3])

    t_top = row_sum(0)   # contributes from row(i) - 1
    t_mid = row_sum(1)   # same row (includes center tap) -> seeds the accumulator
    t_bot = row_sum(2)   # contributes from row(i) + 1

    acc = t_mid + b
    acc = acc + pltpu.roll(t_top, shift=W, axis=1) * row_m1        # t_top[i - W]
    acc = acc + pltpu.roll(t_bot, shift=HW - W, axis=1) * row_p1   # t_bot[i + W]

    # Pixel attention gate: x * sigmoid(conv(x) + b). exp + approx reciprocal
    # both execute on the EUP slot (free next to the VPU FMAs).
    gate = pl.reciprocal(1.0 + jnp.exp(-acc), approx=True)
    o_ref[0] = (xf * gate).astype(o_ref.dtype)


def _pick_cblk(C, HW, itemsize):
    """Largest channel block (multiple of 8, divides C) within a VMEM budget."""
    if C % 8 != 0:
        return C
    # Per-step footprint: double-buffered in/out blocks + ~6 f32 temporaries.
    def footprint(cblk):
        return cblk * HW * (4 * itemsize + 6 * 4)
    budget = 14 * 1024 * 1024   # comfortable on v7x (64 MiB) and v5e defaults
    for cand in (256, 128, 64, 32, 16, 8):
        if C % cand == 0 and footprint(cand) <= budget:
            return cand
    return 8


def pa_forward(x, weight, bias):
    """PA forward pass in native NCHW.

    x:      (N, C, H, W)
    weight: (C, 1, 3, 3)   PyTorch depthwise Conv2d weight
    bias:   (C,)
    returns (N, C, H, W)
    """
    N, C, H, W = x.shape
    HW = H * W
    cblk = _pick_cblk(C, HW, x.dtype.itemsize)

    x_flat = x.reshape(N, C, HW)          # contiguous collapse (free)
    w_taps = weight.reshape(C, 9)         # one contiguous tiny block per channel tile
    b_c1 = bias.reshape(C, 1)

    # Precomputed boundary masks (zero-padding semantics), shared by all blocks.
    idx = jnp.arange(HW, dtype=jnp.int32)
    col = idx % W
    masks = jnp.stack([
        col >= 1,                 # left neighbor valid
        col <= W - 2,             # right neighbor valid
        idx >= W,                 # top neighbor valid
        idx < (H - 1) * W,        # bottom neighbor valid
    ]).astype(jnp.float32)        # (4, HW)

    cost = pl.CostEstimate(
        flops=25 * N * C * HW,
        transcendentals=2 * N * C * HW,
        bytes_accessed=2 * N * C * HW * x.dtype.itemsize + (10 * C + 4 * HW) * 4,
    )

    out_flat = pl.pallas_call(
        partial(_pa_kernel, H=H, W=W),
        out_shape=jax.ShapeDtypeStruct((N, C, HW), x.dtype),
        grid_spec=pltpu.PrefetchScalarGridSpec(
            num_scalar_prefetch=0,
            # n innermost: weight/bias/mask block indices are constant across it,
            # so Pallas skips their re-DMA for N-1 of every N steps.
            grid=(C // cblk, N),
            in_specs=[
                pl.BlockSpec((1, cblk, HW), lambda c, n: (n, c, 0)),
                pl.BlockSpec((cblk, 9), lambda c, n: (c, 0)),
                pl.BlockSpec((cblk, 1), lambda c, n: (c, 0)),
                pl.BlockSpec((4, HW), lambda c, n: (0, 0)),
            ],
            out_specs=pl.BlockSpec((1, cblk, HW), lambda c, n: (n, c, 0)),
        ),
        compiler_params=pltpu.CompilerParams(
            dimension_semantics=("parallel", "parallel"),
            vmem_limit_bytes=32 * 1024 * 1024,
        ),
        cost_estimate=cost,
    )(x_flat, w_taps, b_c1, masks)

    return out_flat.reshape(N, C, H, W)


def pa_reference(x, weight, bias):
    """Pure-JAX reference (lax depthwise conv, NCHW) for correctness checking."""
    C = x.shape[1]
    xf = x.astype(jnp.float32)
    conv = jax.lax.conv_general_dilated(
        xf, weight.astype(jnp.float32),
        window_strides=(1, 1), padding=((1, 1), (1, 1)),
        dimension_numbers=("NCHW", "OIHW", "NCHW"),
        feature_group_count=C,
    ) + bias.astype(jnp.float32)[None, :, None, None]
    return (xf * jax.nn.sigmoid(conv)).astype(x.dtype)


if __name__ == "__main__":
    key = jax.random.PRNGKey(0)
    k_x, k_w, k_b = jax.random.split(key, 3)

    N, C, H, W = 2, 4, 16, 16  # small shapes consistent with PA(dim=4)
    x = jax.random.normal(k_x, (N, C, H, W), dtype=jnp.float32)

    # Module parameters: Conv2d(dim, dim, 3, padding=1, groups=dim)
    weight = jax.random.normal(k_w, (C, 1, 3, 3), dtype=jnp.float32) * 0.1
    bias = jax.random.normal(k_b, (C,), dtype=jnp.float32) * 0.1

    out = pa_forward(x, weight, bias)
    out = jax.block_until_ready(out)

    ref = pa_reference(x, weight, bias)
    assert out.shape == (N, C, H, W)
    # Tolerance loosened for the approx (EUP) reciprocal in the sigmoid gate.
    assert jnp.allclose(out, ref, atol=5e-3, rtol=5e-3), "mismatch vs reference"

    print("KERNEL_OK")
</pallas_src>

<mosaic_0001>
module attributes {stable_mosaic.version = 11 : i64} {
  func.func @_pa_kernel(%arg0: i32, %arg1: i32, %arg2: memref<1x4x256xf32, #tpu.memory_space<vmem>>, %arg3: memref<4x9xf32, #tpu.memory_space<vmem>>, %arg4: memref<4x1xf32, #tpu.memory_space<vmem>>, %arg5: memref<4x256xf32, #tpu.memory_space<vmem>>, %arg6: memref<1x4x256xf32, #tpu.memory_space<vmem>>) attributes {dimension_semantics = [#tpu.dimension_semantics<parallel>, #tpu.dimension_semantics<parallel>], iteration_bounds = array<i64: 1, 2>, scalar_prefetch = 0 : i64, scratch_operands = 0 : i64, tpu.core_type = #tpu.core_type<tc>, window_params = [{transform_indices = @transform_0, window_bounds = array<i64: 1, 4, 256>}, {transform_indices = @transform_1, window_bounds = array<i64: 4, 9>}, {transform_indices = @transform_2, window_bounds = array<i64: 4, 1>}, {pipeline_mode = #tpu.pipeline_mode<synchronous>, transform_indices = @transform_3, window_bounds = array<i64: 4, 256>}, {transform_indices = @transform_4, window_bounds = array<i64: 1, 4, 256>}]} {
    %c0 = arith.constant 0 : index
    %c0_0 = arith.constant 0 : index
    %c0_1 = arith.constant 0 : index
    %0 = vector.load %arg2[%c0, %c0_0, %c0_1] : memref<1x4x256xf32, #tpu.memory_space<vmem>>, vector<1x4x256xf32>
    %1 = vector.shape_cast %0 : vector<1x4x256xf32> to vector<4x256xf32>
    %c0_2 = arith.constant 0 : index
    %c0_3 = arith.constant 0 : index
    %2 = vector.load %arg3[%c0_2, %c0_3] : memref<4x9xf32, #tpu.memory_space<vmem>>, vector<4x9xf32>
    %c0_4 = arith.constant 0 : index
    %c0_5 = arith.constant 0 : index
    %3 = vector.load %arg4[%c0_4, %c0_5] : memref<4x1xf32, #tpu.memory_space<vmem>>, vector<4x1xf32>
    %c0_6 = arith.constant 0 : index
    %c0_7 = arith.constant 0 : index
    %4 = vector.load %arg5[%c0_6, %c0_7] : memref<4x256xf32, #tpu.memory_space<vmem>>, vector<4x256xf32>
    %5 = vector.extract_strided_slice %4 {offsets = [0, 0], sizes = [1, 256], strides = [1, 1]} : vector<4x256xf32> to vector<1x256xf32>
    %6 = vector.extract_strided_slice %4 {offsets = [1, 0], sizes = [1, 256], strides = [1, 1]} : vector<4x256xf32> to vector<1x256xf32>
    %7 = vector.extract_strided_slice %4 {offsets = [2, 0], sizes = [1, 256], strides = [1, 1]} : vector<4x256xf32> to vector<1x256xf32>
    %8 = vector.extract_strided_slice %4 {offsets = [3, 0], sizes = [1, 256], strides = [1, 1]} : vector<4x256xf32> to vector<1x256xf32>
    %c1_i32 = arith.constant 1 : i32
    %9 = tpu.dynamic_rotate %1 by %c1_i32 dim 1 : vector<4x256xf32>, i32 -> vector<4x256xf32>
    %10 = vector.broadcast %5 : vector<1x256xf32> to vector<4x256xf32>
    %11 = arith.mulf %9, %10 : vector<4x256xf32>
    %c255_i32 = arith.constant 255 : i32
    %12 = tpu.dynamic_rotate %1 by %c255_i32 dim 1 : vector<4x256xf32>, i32 -> vector<4x256xf32>
    %13 = vector.broadcast %6 : vector<1x256xf32> to vector<4x256xf32>
    %14 = arith.mulf %12, %13 : vector<4x256xf32>
    %15 = vector.extract_strided_slice %2 {offsets = [0, 0], sizes = [4, 1], strides = [1, 1]} : vector<4x9xf32> to vector<4x1xf32>
    %16 = vector.broadcast %15 : vector<4x1xf32> to vector<4x256xf32>
    %17 = arith.mulf %11, %16 : vector<4x256xf32>
    %18 = vector.extract_strided_slice %2 {offsets = [0, 1], sizes = [4, 1], strides = [1, 1]} : vector<4x9xf32> to vector<4x1xf32>
    %19 = vector.broadcast %18 : vector<4x1xf32> to vector<4x256xf32>
    %20 = arith.mulf %1, %19 : vector<4x256xf32>
    %21 = arith.addf %17, %20 : vector<4x256xf32>
    %22 = vector.extract_strided_slice %2 {offsets = [0, 2], sizes = [4, 1], strides = [1, 1]} : vector<4x9xf32> to vector<4x1xf32>
    %23 = vector.broadcast %22 : vector<4x1xf32> to vector<4x256xf32>
    %24 = arith.mulf %14, %23 : vector<4x256xf32>
    %25 = arith.addf %21, %24 : vector<4x256xf32>
    %26 = vector.extract_strided_slice %2 {offsets = [0, 3], sizes = [4, 1], strides = [1, 1]} : vector<4x9xf32> to vector<4x1xf32>
    %27 = vector.broadcast %26 : vector<4x1xf32> to vector<4x256xf32>
    %28 = arith.mulf %11, %27 : vector<4x256xf32>
    %29 = vector.extract_strided_slice %2 {offsets = [0, 4], sizes = [4, 1], strides = [1, 1]} : vector<4x9xf32> to vector<4x1xf32>
    %30 = vector.broadcast %29 : vector<4x1xf32> to vector<4x256xf32>
    %31 = arith.mulf %1, %30 : vector<4x256xf32>
    %32 = arith.addf %28, %31 : vector<4x256xf32>
    %33 = vector.extract_strided_slice %2 {offsets = [0, 5], sizes = [4, 1], strides = [1, 1]} : vector<4x9xf32> to vector<4x1xf32>
    %34 = vector.broadcast %33 : vector<4x1xf32> to vector<4x256xf32>
    %35 = arith.mulf %14, %34 : vector<4x256xf32>
    %36 = arith.addf %32, %35 : vector<4x256xf32>
    %37 = vector.extract_strided_slice %2 {offsets = [0, 6], sizes = [4, 1], strides = [1, 1]} : vector<4x9xf32> to vector<4x1xf32>
    %38 = vector.broadcast %37 : vector<4x1xf32> to vector<4x256xf32>
    %39 = arith.mulf %11, %38 : vector<4x256xf32>
    %40 = vector.extract_strided_slice %2 {offsets = [0, 7], sizes = [4, 1], strides = [1, 1]} : vector<4x9xf32> to vector<4x1xf32>
    %41 = vector.broadcast %40 : vector<4x1xf32> to vector<4x256xf32>
    %42 = arith.mulf %1, %41 : vector<4x256xf32>
    %43 = arith.addf %39, %42 : vector<4x256xf32>
    %44 = vector.extract_strided_slice %2 {offsets = [0, 8], sizes = [4, 1], strides = [1, 1]} : vector<4x9xf32> to vector<4x1xf32>
    %45 = vector.broadcast %44 : vector<4x1xf32> to vector<4x256xf32>
    %46 = arith.mulf %14, %45 : vector<4x256xf32>
    %47 = arith.addf %43, %46 : vector<4x256xf32>
    %48 = vector.broadcast %3 : vector<4x1xf32> to vector<4x256xf32>
    %49 = arith.addf %36, %48 : vector<4x256xf32>
    %c16_i32 = arith.constant 16 : i32
    %50 = tpu.dynamic_rotate %25 by %c16_i32 dim 1 : vector<4x256xf32>, i32 -> vector<4x256xf32>
    %51 = vector.broadcast %7 : vector<1x256xf32> to vector<4x256xf32>
    %52 = arith.mulf %50, %51 : vector<4x256xf32>
    %53 = arith.addf %49, %52 : vector<4x256xf32>
    %c240_i32 = arith.constant 240 : i32
    %54 = tpu.dynamic_rotate %47 by %c240_i32 dim 1 : vector<4x256xf32>, i32 -> vector<4x256xf32>
    %55 = vector.broadcast %8 : vector<1x256xf32> to vector<4x256xf32>
    %56 = arith.mulf %54, %55 : vector<4x256xf32>
    %57 = arith.addf %53, %56 : vector<4x256xf32>
    %cst = arith.constant 0.000000e+00 : f32
    %58 = vector.broadcast %cst : f32 to vector<4x256xf32>
    %59 = arith.subf %58, %57 : vector<4x256xf32>
    %60 = math.exp %59 : vector<4x256xf32>
    %cst_8 = arith.constant 1.000000e+00 : f32
    %61 = vector.broadcast %cst_8 : f32 to vector<4x256xf32>
    %62 = arith.addf %61, %60 : vector<4x256xf32>
    %63 = tpu.reciprocal %62 {approx = true} : vector<4x256xf32> -> vector<4x256xf32>
    %64 = arith.mulf %1, %63 : vector<4x256xf32>
    %c0_9 = arith.constant 0 : index
    %c0_10 = arith.constant 0 : index
    %c0_11 = arith.constant 0 : index
    %65 = vector.load %arg6[%c0_9, %c0_10, %c0_11] : memref<1x4x256xf32, #tpu.memory_space<vmem>>, vector<1x4x256xf32>
    %66 = vector.shape_cast %65 : vector<1x4x256xf32> to vector<4x256xf32>
    %67 = vector.shape_cast %64 : vector<4x256xf32> to vector<1x4x256xf32>
    tpu.vector_store %arg6[%c0_9, %c0_10, %c0_11], %67 {strides = array<i32>} : memref<1x4x256xf32, #tpu.memory_space<vmem>>, vector<1x4x256xf32>,
    return
  }
  func.func @transform_0(%arg0: i32, %arg1: i32) -> (i32, i32, i32) {
    %c0_i32 = arith.constant 0 : i32
    %c0_i32_0 = arith.constant 0 : i32
    return %arg1, %arg0, %c0_i32 : i32, i32, i32
  }
  func.func @transform_1(%arg0: i32, %arg1: i32) -> (i32, i32) {
    %c0_i32 = arith.constant 0 : i32
    %c0_i32_0 = arith.constant 0 : i32
    return %arg0, %c0_i32 : i32, i32
  }
  func.func @transform_2(%arg0: i32, %arg1: i32) -> (i32, i32) {
    %c0_i32 = arith.constant 0 : i32
    %c0_i32_0 = arith.constant 0 : i32
    return %arg0, %c0_i32 : i32, i32
  }
  func.func @transform_3(%arg0: i32, %arg1: i32) -> (i32, i32) {
    %c0_i32 = arith.constant 0 : i32
    %c0_i32_0 = arith.constant 0 : i32
    %c0_i32_1 = arith.constant 0 : i32
    return %c0_i32, %c0_i32_0 : i32, i32
  }
  func.func @transform_4(%arg0: i32, %arg1: i32) -> (i32, i32, i32) {
    %c0_i32 = arith.constant 0 : i32
    %c0_i32_0 = arith.constant 0 : i32
    return %arg1, %arg0, %c0_i32 : i32, i32, i32
  }
}

</mosaic_0001>

<llo_original>
// kernel: tpu_custom_call.1
$region0: #{tpu_custom_call.1}
  #allocation0 [shape = 'u32[]', space=smem, size = 0x4, offset = 0x4, fixed_abs, tag = 'smem constant byte address 0x4 - core index']
  #allocation1 [shape = 'u32[144,128]{1,0:T(1,128)}', space=vmem, size = 0x12000, scoped, tag = 'internal scratch']
  %s0 = inlined_call_operand.hbm [shape: f32[2,4,256], index: 0, kind: input, shape index: {}]
  %s1 = inlined_call_operand.vmem [shape: f32[4,9], index: 1, kind: input, shape index: {}]
  %s2 = inlined_call_operand.vmem [shape: f32[4,1], index: 2, kind: input, shape index: {}]
  %s3 = inlined_call_operand.vmem [shape: f32[4,256], index: 3, kind: input, shape index: {}]
  %s4 = inlined_call_operand.hbm [shape: f32[2,4,256], index: 4, kind: output, shape index: {}]
  %s5 = sld [smem:[#allocation0]]
  $region53: #{tpu_custom_call.1} parent=0
    _
  %s7 = ssub.s32 1, %s5
  %s8 = scalar_select 0, %s7, %s5
  $region1: #{tpu_custom_call.1} parent=0
    #allocation2 [shape = 'u8[8192]{0}', space=vmem, size = 0x2000, scoped, tag = 'input window, operand 0']
    #allocation3 [shape = 's32[2]{0}', space=sflag, size = 0x8, scoped, tag = 'scoped memory for tpu_custom_call.1']
    #allocation4 [shape = 's32[2]{0}', space=sflag, size = 0x8, scoped, tag = 'scoped memory for tpu_custom_call.1']
    #allocation5 [shape = 'u8[8192]{0}', space=vmem, size = 0x2000, scoped, tag = 'output window, operand 0']
    %9 = vsyncpa [#allocation3], 0
    %s10 = scalar_lea.sflag [#allocation3], 1
    %11 = vsyncpa %s10, 0
    %12 = vsyncpa [#allocation4], 0
    %s13 = scalar_lea.sflag [#allocation4], 1
    %14 = vsyncpa %s13, 0
    loop: start=0, step=1, limit=4
    $region2: #{tpu_custom_call.1} parent=1 // loop_pre_header
      _
    $region3: #{tpu_custom_call.1} parent=1 // loop_header
      %s16 = sphi 0, %s20
      %p17 = scmp.ge.s32.totalorder %s16, 4
      %s23 = sphi 0, %s35
      %s24 = sphi 0, %s31
      %s25 = sphi 0, %s23
      %s26 = sphi 0, %s24
      %s27 = sphi 0, %s25
      %s28 = sphi 0, %s26
      %s40 = sphi 0, %s42
      %s43 = sphi 0, %s40
      %s44 = sphi 0, %s43
      %s60 = sphi 0, %s44
      %s66 = sphi 0, %s68
      %s69 = sphi 0, %s66
      %s70 = sphi 0, %s69
      %s86 = sphi 0, %s70
      %s92 = sphi 0, %s94
      %s95 = sphi 0, %s92
      %s96 = sphi 0, %s95
      %s112 = sphi 0, %s96
      %s116 = sphi 0, %s116
      %s118 = sphi 0, %s116
      %s119 = sphi 0, %s118
      %s133 = sphi 0, %s119
      %s141 = sphi 0, %s143
      %s144 = sphi 0, %s141
      %s145 = sphi 0, %s144
      %s161 = sphi 0, %s145
    $region4: #{tpu_custom_call.1} parent=1 // loop_header_branch
      %19 = sbr.rel (%p17) target = $region8
    $region5: #{tpu_custom_call.1} parent=1 // loop_body
      %s21 = ssub.s32 %s16, 1
      %s22 = ssub.s32 %s16, 2
      %s29 = sadd.s32 1, %s24
      %p30 = scmp.ge.s32.totalorder %s29, 2
      %s31 = scalar_select %p30, 0, %s29
      %s32 = sadd.s32 1, %s23
      %s33 = scalar_select %p30, %s32, %s23
      %p34 = scmp.ge.s32.totalorder %s33, 1
      %s35 = scalar_select %p34, 0, %s33
      %s36 = ssub.s32 %s24, %s31
      %s37 = ssub.s32 %s23, %s35
      %s38 = sor.u32 %s36, %s37
      %p39 = scmp.eq.s32.totalorder %s38, 0
      %s41 = sadd.s32 %s40, 1
      %s42 = scalar_select %p39, %s40, %s41
      %p45 = pneg %p39
      %p46 = scmp.eq.s32.totalorder %s16, 1
      %p47 = por %p45, %p46
      %p48 = scmp.ne.s32.totalorder %s40, %s43
      %p49 = scmp.eq.s32.totalorder %s16, 0
      %p50 = por %p48, %p49
      %p51 = scmp.ne.s32.totalorder %s40, %s43
      %p52 = scmp.eq.s32.totalorder %s21, 1
      %p53 = por %p51, %p52
      %p54 = scmp.ne.s32.totalorder %s43, %s44
      %p55 = scmp.eq.s32.totalorder %s21, 0
      %p56 = por %p54, %p55
      %p57 = scmp.ne.s32.totalorder %s43, %s44
      %p58 = scmp.eq.s32.totalorder %s22, 1
      %p59 = por %p57, %p58
      %p61 = scmp.ne.s32.totalorder %s44, %s60
      %p62 = scmp.eq.s32.totalorder %s22, 0
      %p63 = por %p61, %p62
      %s64 = ssub.s32 %s23, %s35
      %p65 = scmp.eq.s32.totalorder %s64, 0
      %s67 = sadd.s32 %s66, 1
      %s68 = scalar_select %p65, %s66, %s67
      %p71 = pneg %p65
      %p72 = scmp.eq.s32.totalorder %s16, 1
      %p73 = por %p71, %p72
      %p74 = scmp.ne.s32.totalorder %s66, %s69
      %p75 = scmp.eq.s32.totalorder %s16, 0
      %p76 = por %p74, %p75
      %p77 = scmp.ne.s32.totalorder %s66, %s69
      %p78 = scmp.eq.s32.totalorder %s21, 1
      %p79 = por %p77, %p78
      %p80 = scmp.ne.s32.totalorder %s69, %s70
      %p81 = scmp.eq.s32.totalorder %s21, 0
      %p82 = por %p80, %p81
      %p83 = scmp.ne.s32.totalorder %s69, %s70
      %p84 = scmp.eq.s32.totalorder %s22, 1
      %p85 = por %p83, %p84
      %p87 = scmp.ne.s32.totalorder %s70, %s86
      %p88 = scmp.eq.s32.totalorder %s22, 0
      %p89 = por %p87, %p88
      %s90 = ssub.s32 %s23, %s35
      %p91 = scmp.eq.s32.totalorder %s90, 0
      %s93 = sadd.s32 %s92, 1
      %s94 = scalar_select %p91, %s92, %s93
      %p97 = pneg %p91
      %p98 = scmp.eq.s32.totalorder %s16, 1
      %p99 = por %p97, %p98
      %p100 = scmp.ne.s32.totalorder %s92, %s95
      %p101 = scmp.eq.s32.totalorder %s16, 0
      %p102 = por %p100, %p101
      %p103 = scmp.ne.s32.totalorder %s92, %s95
      %p104 = scmp.eq.s32.totalorder %s21, 1
      %p105 = por %p103, %p104
      %p106 = scmp.ne.s32.totalorder %s95, %s96
      %p107 = scmp.eq.s32.totalorder %s21, 0
      %p108 = por %p106, %p107
      %p109 = scmp.ne.s32.totalorder %s95, %s96
      %p110 = scmp.eq.s32.totalorder %s22, 1
      %p111 = por %p109, %p110
      %p113 = scmp.ne.s32.totalorder %s96, %s112
      %p114 = scmp.eq.s32.totalorder %s22, 0
      %p115 = por %p113, %p114
      %s117 = sadd.s32 %s116, 1
      %p120 = scmp.eq.s32.totalorder %s16, 1
      %p121 = scmp.ne.s32.totalorder %s116, %s118
      %p122 = scmp.eq.s32.totalorder %s16, 0
      %p123 = por %p121, %p122
      %p124 = scmp.ne.s32.totalorder %s116, %s118
      %p125 = scmp.eq.s32.totalorder %s21, 1
      %p126 = por %p124, %p125
      %p127 = scmp.ne.s32.totalorder %s118, %s119
      %p128 = scmp.eq.s32.totalorder %s21, 0
      %p129 = por %p127, %p128
      %p130 = scmp.ne.s32.totalorder %s118, %s119
      %p131 = scmp.eq.s32.totalorder %s22, 1
      %p132 = por %p130, %p131
      %p134 = scmp.ne.s32.totalorder %s119, %s133
      %p135 = scmp.eq.s32.totalorder %s22, 0
      %p136 = por %p134, %p135
      %s137 = ssub.s32 %s24, %s31
      %s138 = ssub.s32 %s23, %s35
      %s139 = sor.u32 %s137, %s138
      %p140 = scmp.eq.s32.totalorder %s139, 0
      %s142 = sadd.s32 %s141, 1
      %s143 = scalar_select %p140, %s141, %s142
      %p146 = pneg %p140
      %p147 = scmp.eq.s32.totalorder %s16, 1
      %p148 = por %p146, %p147
      %p149 = scmp.ne.s32.totalorder %s141, %s144
      %p150 = scmp.eq.s32.totalorder %s16, 0
      %p151 = por %p149, %p150
      %p152 = scmp.ne.s32.totalorder %s141, %s144
      %p153 = scmp.eq.s32.totalorder %s21, 1
      %p154 = por %p152, %p153
      %p155 = scmp.ne.s32.totalorder %s144, %s145
      %p156 = scmp.eq.s32.totalorder %s21, 0
      %p157 = por %p155, %p156
      %p158 = scmp.ne.s32.totalorder %s144, %s145
      %p159 = scmp.eq.s32.totalorder %s22, 1
      %p160 = por %p158, %p159
      %p162 = scmp.ne.s32.totalorder %s145, %s161
      %p163 = scmp.eq.s32.totalorder %s22, 0
      %p164 = por %p162, %p163
      %p165 = scmp.le.s32.totalorder 1, %s16
      %p166 = scmp.lt.s32.totalorder %s16, 3
      %p167 = pnand %p165, %p166
      %p168 = pneg %p167
      // Predicated region
      $region9: #{tpu_custom_call.1} parent=5 // pred_check
        _
      $region10: #{tpu_custom_call.1} parent=5 // pred_check_branch
        %170 = sbr.rel (%p167) target = $region12
      $region11: #{tpu_custom_call.1} parent=5 // pred_region
        %s171 = ssub.s32 %s16, 1
        // Predicated region
        $region13: #{tpu_custom_call.1} parent=11 // pred_check
          %p172 = pneg %p82
        $region14: #{tpu_custom_call.1} parent=11 // pred_check_branch
          %174 = sbr.rel (%p172) target = $region16
        $region15: #{tpu_custom_call.1} parent=11 // pred_region
          %p175 = scmp.lt.s32.totalorder %s25, 0
          %s176 = scalar_select %p175, %s25, 0
          %s177 = smul.addr %s176, 4
          %s178 = scalar_lea.vmem %s1, %s177
        $region16: #{tpu_custom_call.1} parent=11 // pred_fallthru
          _
        // Predicated region
        $region17: #{tpu_custom_call.1} parent=11 // pred_check
          %p179 = pneg %p108
        $region18: #{tpu_custom_call.1} parent=11 // pred_check_branch
          %181 = sbr.rel (%p179) target = $region20
        $region19: #{tpu_custom_call.1} parent=11 // pred_region
          %p182 = scmp.lt.s32.totalorder %s25, 0
          %s183 = scalar_select %p182, %s25, 0
          %s184 = smul.addr %s183, 4
          %s185 = scalar_lea.vmem %s2, %s184
        $region20: #{tpu_custom_call.1} parent=11 // pred_fallthru
          _
        // Predicated region
        $region21: #{tpu_custom_call.1} parent=11 // pred_check
          %p186 = pneg %p129
        $region22: #{tpu_custom_call.1} parent=11 // pred_check_branch
          %188 = sbr.rel (%p186) target = $region24
        $region23: #{tpu_custom_call.1} parent=11 // pred_region
          _
        $region24: #{tpu_custom_call.1} parent=11 // pred_fallthru
          _
      $region12: #{tpu_custom_call.1} parent=5 // pred_fallthru
        _
      %p189 = scmp.lt.s32.totalorder %s16, 2
      // Predicated region
      $region25: #{tpu_custom_call.1} parent=5 // pred_check
        %p190 = pneg %p189
      $region26: #{tpu_custom_call.1} parent=5 // pred_check_branch
        %192 = sbr.rel (%p190) target = $region28
      $region27: #{tpu_custom_call.1} parent=5 // pred_region
        // Predicated region
        $region29: #{tpu_custom_call.1} parent=27 // pred_check
          %p193 = pneg %p50
        $region30: #{tpu_custom_call.1} parent=27 // pred_check_branch
          %195 = sbr.rel (%p193) target = $region32
        $region31: #{tpu_custom_call.1} parent=27 // pred_region
          %s196 = sand.u32 %s40, 1
          %s197 = scalar_lea.sflag [#allocation3], %s196
          %s198 = sand.u32 %s40, 1
          %s199 = smul.addr %s198, 8
          %s200 = scalar_lea.vmem [#allocation2], %s199
          %s202 = ssub.s32 128, 128
          %203 = vsyncadd %s197, %s202
          %s204 = smul.addr %s23, 2
          %s205 = smul.addr %s24, 2
          %s206 = sadd.s32 %s204, %s205
          %s207 = smul.addr %s206, 64
          %s208 = scalar_lea.hbm %s0, %s207
          %s210 = sshll.u32 %s200, 4
          %s211 = int_to_ptr.vmem [resolvable:$true] %s210
          %213 = dma.hbm_to_vmem [thread:$0]  %s208, 128, %s211, %s197
        $region32: #{tpu_custom_call.1} parent=27 // pred_fallthru
          _
      $region28: #{tpu_custom_call.1} parent=5 // pred_fallthru
        _
      %p214 = scmp.le.s32.totalorder 1, %s16
      %p215 = scmp.lt.s32.totalorder %s16, 3
      %p216 = pnand %p214, %p215
      %p217 = pneg %p216
      // Predicated region
      $region33: #{tpu_custom_call.1} parent=5 // pred_check
        _
      $region34: #{tpu_custom_call.1} parent=5 // pred_check_branch
        %219 = sbr.rel (%p216) target = $region36
      $region35: #{tpu_custom_call.1} parent=5 // pred_region
        %s220 = ssub.s32 %s16, 1
        %s221 = sand.u32 %s43, 1
        %s222 = scalar_lea.sflag [#allocation3], %s221
        %s223 = sand.u32 %s43, 1
        %s224 = smul.addr %s223, 8
        %s225 = scalar_lea.vmem [#allocation2], %s224
        // Predicated region
        $region37: #{tpu_custom_call.1} parent=35 // pred_check
          %p226 = pneg %p56
        $region38: #{tpu_custom_call.1} parent=35 // pred_check_branch
          %228 = sbr.rel (%p226) target = $region40
        $region39: #{tpu_custom_call.1} parent=35 // pred_region
          %229 = dma.done %s222, 128
        $region40: #{tpu_custom_call.1} parent=35 // pred_fallthru
          _
        %s230 = sand.u32 %s43, 1
        %s231 = scalar_lea.sflag [#allocation3], %s230
        %s232 = sand.u32 %s43, 1
        %s233 = smul.addr %s232, 8
        %s234 = scalar_lea.vmem [#allocation2], %s233
        %p235 = pneg %p56
        %p236 = pneg %p53
        %p237 = scmp.lt.s32.totalorder %s25, 0
        %s238 = scalar_select %p237, %s25, 0
        %s239 = smul.addr %s238, 4
        %s240 = scalar_lea.vmem %s1, %s239
        %p241 = pneg %p82
        %p242 = pneg %p79
        %p243 = scmp.lt.s32.totalorder %s25, 0
        %s244 = scalar_select %p243, %s25, 0
        %s245 = smul.addr %s244, 4
        %s246 = scalar_lea.vmem %s2, %s245
        %p247 = pneg %p108
        %p248 = pneg %p105
        %p249 = pneg %p129
        %p250 = pneg %p126
        %p251 = pneg %p157
        %p252 = pneg %p154
        %s253 = sand.u32 %s144, 1
        %s254 = scalar_lea.sflag [#allocation4], %s253
        %s255 = sand.u32 %s144, 1
        %s256 = smul.addr %s255, 8
        %s257 = scalar_lea.vmem [#allocation5], %s256
        %p258 = scmp.lt.s32.totalorder %s25, 0
        %s259 = scalar_select %p258, %s25, 0
        %s260 = smul.addr %s259, 4
        %s261 = scalar_lea.vmem %s1, %s260
        %p262 = scmp.lt.s32.totalorder %s25, 0
        %s263 = scalar_select %p262, %s25, 0
        %s264 = smul.addr %s263, 4
        %s265 = scalar_lea.vmem %s2, %s264
        %v266 = vld [vmem:[%s225] sm:$0xff]
        %v267 = vld [vmem:[%s261] sm:$0xf]
        %v268 = vld [vmem:[%s265] sm:$0xf]
        %v269 = vld [vmem:[%s3] sm:$0xff]
        %v271 = vcombine.high %v266, %v266
        %273 = vrot.lane.b32.xlu0 %v266, 1
        %v274 = vpop.permute.xlu0 %273
        %275 = vrot.lane.b32.xlu0 %v271, 1
        %v276 = vpop.permute.xlu0 %275
        %v277 = vlaneseq
        %v278 = vand.u32 %v277, 127
        %vm279 = vcmp.lt.s32.totalorder %v278, 1
        %v280 = vsel %vm279, %v274, %v276
        %v281 = vsel %vm279, %v276, %v274
        %v283 = vlaneseq
        %v284 = vshrl.u32 %v283, 7
        %v285 = vsub.s32 0, %v284
        %v286 = vrot.slane %v269, %v285
        %v287 = vlaneseq
        %v288 = vshrl.u32 %v287, 7
        %v289 = vsub.s32 4, %v288
        %v290 = vrot.slane %v269, %v289
        %v293 = vlaneseq
        %v294 = vshrl.u32 %v293, 7
        %v295 = vsub.s32 0, %v294
        %v296 = vrot.slane %v286, %v295
        %v297 = vlaneseq
        %v298 = vshrl.u32 %v297, 7
        %v299 = vsub.s32 0, %v298
        %v300 = vrot.slane %v290, %v299
        %v301 = vmul.f32 %v281, %v296
        %v302 = vmul.f32 %v280, %v300
        %303 = vrot.lane.b32.xlu0 %v266, 127
        %v304 = vpop.permute.xlu0 %303
        %305 = vrot.lane.b32.xlu0 %v271, 127
        %v306 = vpop.permute.xlu0 %305
        %vm307 = vcmp.lt.s32.totalorder %v278, 127
        %v308 = vsel %vm307, %v304, %v306
        %v309 = vsel %vm307, %v306, %v304
        %v310 = vlaneseq
        %v311 = vshrl.u32 %v310, 7
        %v312 = vsub.s32 1, %v311
        %v313 = vrot.slane %v269, %v312
        %v314 = vlaneseq
        %v315 = vshrl.u32 %v314, 7
        %v316 = vsub.s32 5, %v315
        %v317 = vrot.slane %v269, %v316
        %v320 = vlaneseq
        %v321 = vshrl.u32 %v320, 7
        %v322 = vsub.s32 1, %v321
        %v323 = vrot.slane %v313, %v322
        %v324 = vlaneseq
        %v325 = vshrl.u32 %v324, 7
        %v326 = vsub.s32 1, %v325
        %v327 = vrot.slane %v317, %v326
        %v328 = vmul.f32 %v308, %v323
        %v329 = vmul.f32 %v309, %v327
        %331 = vset.pattern.permute.xlu0 0
        %332 = vperm.xlu0 %331, %v267
        %v333 = vpop.permute.xlu0 %332
        %v335 = vmul.f32 %v301, %v333
        %v336 = vmul.f32 %v302, %v333
        %337 = vset.pattern.permute.xlu0 1
        %338 = vperm.xlu0 %337, %v267
        %v339 = vpop.permute.xlu0 %338
        %v341 = vunpack.c.l.s4 839922192
        %v342 = vunpack.c.0.s8 %v341
        %v343 = vlaneseq
        %v344 = vshrl.u32 %v343, 7
        %v345 = vsub.s32 %v342, %v344
        %v346 = vrot.slane %v339, %v345
        %v348 = vmul.f32 %v266, %v346
        %v350 = vcombine.high %v348, %v348
        %v352 = vadd.f32 %v335, %v348
        %v353 = vadd.f32 %v336, %v350
        %354 = vset.pattern.permute.xlu0 2
        %355 = vperm.xlu0 %354, %v267
        %v356 = vpop.permute.xlu0 %355
        %v358 = vmul.f32 %v328, %v356
        %v359 = vmul.f32 %v329, %v356
        %v360 = vadd.f32 %v352, %v358
        %v361 = vadd.f32 %v353, %v359
        %362 = vset.pattern.permute.xlu0 3
        %363 = vperm.xlu0 %362, %v267
        %v364 = vpop.permute.xlu0 %363
        %v366 = vmul.f32 %v301, %v364
        %v367 = vmul.f32 %v302, %v364
        %368 = vset.pattern.permute.xlu0 4
        %369 = vperm.xlu0 %368, %v267
        %v370 = vpop.permute.xlu0 %369
        %v372 = vunpack.c.l.s4 839922192
        %v373 = vunpack.c.0.s8 %v372
        %v374 = vlaneseq
        %v375 = vshrl.u32 %v374, 7
        %v376 = vsub.s32 %v373, %v375
        %v377 = vrot.slane %v370, %v376
        %v379 = vmul.f32 %v266, %v377
        %v381 = vcombine.high %v379, %v379
        %v383 = vadd.f32 %v366, %v379
        %v384 = vadd.f32 %v367, %v381
        %385 = vset.pattern.permute.xlu0 5
        %386 = vperm.xlu0 %385, %v267
        %v387 = vpop.permute.xlu0 %386
        %v389 = vmul.f32 %v328, %v387
        %v390 = vmul.f32 %v329, %v387
        %v391 = vadd.f32 %v383, %v389
        %v392 = vadd.f32 %v384, %v390
        %393 = vset.pattern.permute.xlu0 6
        %394 = vperm.xlu0 %393, %v267
        %v395 = vpop.permute.xlu0 %394
        %v397 = vmul.f32 %v301, %v395
        %v398 = vmul.f32 %v302, %v395
        %399 = vset.pattern.permute.xlu0 7
        %400 = vperm.xlu0 %399, %v267
        %v401 = vpop.permute.xlu0 %400
        %v403 = vunpack.c.l.s4 839922192
        %v404 = vunpack.c.0.s8 %v403
        %v405 = vlaneseq
        %v406 = vshrl.u32 %v405, 7
        %v407 = vsub.s32 %v404, %v406
        %v408 = vrot.slane %v401, %v407
        %v410 = vmul.f32 %v266, %v408
        %v412 = vcombine.high %v410, %v410
        %v414 = vadd.f32 %v397, %v410
        %v415 = vadd.f32 %v398, %v412
        %416 = vset.pattern.permute.xlu0 8
        %417 = vperm.xlu0 %416, %v267
        %v418 = vpop.permute.xlu0 %417
        %v420 = vmul.f32 %v328, %v418
        %v421 = vmul.f32 %v329, %v418
        %v422 = vadd.f32 %v414, %v420
        %v423 = vadd.f32 %v415, %v421
        %425 = vset.pattern.permute.xlu0 0
        %426 = vperm.xlu0 %425, %v268
        %v427 = vpop.permute.xlu0 %426
        %v429 = vadd.f32 %v391, %v427
        %v430 = vadd.f32 %v392, %v427
        %431 = vrot.lane.b32.xlu0 %v360, 16
        %v432 = vpop.permute.xlu0 %431
        %433 = vrot.lane.b32.xlu0 %v361, 16
        %v434 = vpop.permute.xlu0 %433
        %vm435 = vcmp.lt.s32.totalorder %v278, 16
        %v436 = vsel %vm435, %v432, %v434
        %v437 = vsel %vm435, %v434, %v432
        %v438 = vlaneseq
        %v439 = vshrl.u32 %v438, 7
        %v440 = vsub.s32 2, %v439
        %v441 = vrot.slane %v269, %v440
        %v442 = vlaneseq
        %v443 = vshrl.u32 %v442, 7
        %v444 = vsub.s32 6, %v443
        %v445 = vrot.slane %v269, %v444
        %v448 = vlaneseq
        %v449 = vshrl.u32 %v448, 7
        %v450 = vsub.s32 2, %v449
        %v451 = vrot.slane %v441, %v450
        %v452 = vlaneseq
        %v453 = vshrl.u32 %v452, 7
        %v454 = vsub.s32 2, %v453
        %v455 = vrot.slane %v445, %v454
        %v456 = vmul.f32 %v437, %v451
        %v457 = vmul.f32 %v436, %v455
        %v458 = vadd.f32 %v429, %v456
        %v459 = vadd.f32 %v430, %v457
        %460 = vrot.lane.b32.xlu0 %v422, 112
        %v461 = vpop.permute.xlu0 %460
        %462 = vrot.lane.b32.xlu0 %v423, 112
        %v463 = vpop.permute.xlu0 %462
        %vm464 = vcmp.lt.s32.totalorder %v278, 112
        %v465 = vsel %vm464, %v461, %v463
        %v466 = vsel %vm464, %v463, %v461
        %v467 = vlaneseq
        %v468 = vshrl.u32 %v467, 7
        %v469 = vsub.s32 3, %v468
        %v470 = vrot.slane %v269, %v469
        %v471 = vlaneseq
        %v472 = vshrl.u32 %v471, 7
        %v473 = vsub.s32 7, %v472
        %v474 = vrot.slane %v269, %v473
        %v477 = vlaneseq
        %v478 = vshrl.u32 %v477, 7
        %v479 = vsub.s32 3, %v478
        %v480 = vrot.slane %v470, %v479
        %v481 = vlaneseq
        %v482 = vshrl.u32 %v481, 7
        %v483 = vsub.s32 3, %v482
        %v484 = vrot.slane %v474, %v483
        %v485 = vmul.f32 %v465, %v480
        %v486 = vmul.f32 %v466, %v484
        %v487 = vadd.f32 %v458, %v485
        %v488 = vadd.f32 %v459, %v486
        %v489 = vsub.f32 0.0, %v487
        %v490 = vsub.f32 0.0, %v488
        %v491 = vmul.f32 %v489, 1.442695
        %v492 = vpow.pop %v491
        %v493 = vmul.f32 %v490, 1.442695
        %v494 = vpow.pop %v493
        %v495 = vadd.f32 %v492, 1.0
        %v496 = vadd.f32 %v494, 1.0
        %v497 = vrcp.pop %v495
        %v498 = vrcp.pop %v496
        %v501 = vcombine.low %v497, %v498
        %v503 = vmul.f32 %v266, %v501
        %504 = vst [vmem:[%s257] sm:$0xff] %v503
        %s505 = sand.u32 %s144, 1
        %s506 = scalar_lea.sflag [#allocation4], %s505
        %s507 = sand.u32 %s144, 1
        %s508 = smul.addr %s507, 8
        %s509 = scalar_lea.vmem [#allocation5], %s508
        // Predicated region
        $region41: #{tpu_custom_call.1} parent=35 // pred_check
          %p510 = pneg %p154
        $region42: #{tpu_custom_call.1} parent=35 // pred_check_branch
          %512 = sbr.rel (%p510) target = $region44
        $region43: #{tpu_custom_call.1} parent=35 // pred_region
          %s514 = ssub.s32 128, 128
          %515 = vsyncadd %s506, %s514
          %s516 = smul.addr %s25, 2
          %s517 = smul.addr %s26, 2
          %s518 = sadd.s32 %s516, %s517
          %s519 = smul.addr %s518, 64
          %s520 = scalar_lea.hbm %s4, %s519
          %s522 = sshll.u32 %s509, 4
          %s523 = int_to_ptr.vmem [resolvable:$true] %s522
          %525 = dma.vmem_to_hbm [thread:$0]  %s523, 128, %s520, %s506
        $region44: #{tpu_custom_call.1} parent=35 // pred_fallthru
          _
      $region36: #{tpu_custom_call.1} parent=5 // pred_fallthru
        _
      %p526 = scmp.le.s32.totalorder 2, %s16
      // Predicated region
      $region45: #{tpu_custom_call.1} parent=5 // pred_check
        %p527 = pneg %p526
      $region46: #{tpu_custom_call.1} parent=5 // pred_check_branch
        %529 = sbr.rel (%p527) target = $region48
      $region47: #{tpu_custom_call.1} parent=5 // pred_region
        %s530 = ssub.s32 %s16, 2
        // Predicated region
        $region49: #{tpu_custom_call.1} parent=47 // pred_check
          %p531 = pneg %p160
        $region50: #{tpu_custom_call.1} parent=47 // pred_check_branch
          %533 = sbr.rel (%p531) target = $region52
        $region51: #{tpu_custom_call.1} parent=47 // pred_region
          %s534 = sand.u32 %s145, 1
          %s535 = scalar_lea.sflag [#allocation4], %s534
          %s536 = sand.u32 %s145, 1
          %s537 = smul.addr %s536, 8
          %s538 = scalar_lea.vmem [#allocation5], %s537
          %539 = dma.done %s535, 128
        $region52: #{tpu_custom_call.1} parent=47 // pred_fallthru
          _
      $region48: #{tpu_custom_call.1} parent=5 // pred_fallthru
        _
    $region6: #{tpu_custom_call.1} parent=1 // loop_footer
      %s20 = sadd.s32 1, %s16
    $region7: #{tpu_custom_call.1} parent=1 // loop_footer_branch
      %15 = sbr.rel target = $region3
    $region8: #{tpu_custom_call.1} parent=1 // loop_exit
      _
    %540 = vsyncpa [#allocation3], 1
    %s541 = scalar_lea.sflag [#allocation3], 1
    %542 = vsyncpa %s541, 1
    %543 = vsyncpa [#allocation4], 1
    %s544 = scalar_lea.sflag [#allocation4], 1
    %545 = vsyncpa %s544, 1

</llo_original>
